<compile_context>
chip_gen: v7x
topology: tpu7x:2x2x1
jax: 0.10.0
libtpu: 0.0.40
codegen_flags: <defaults>
</compile_context>

<pallas_src>
import functools

import jax
import jax.numpy as jnp
from jax import lax
from jax.experimental import pallas as pl
from jax.experimental.pallas import tpu as pltpu

_TL_MAX = 512     # max L_out tile (lane width of one output block)
_HALO_BLK = 128   # lane granularity of the halo view of x


def _conv1d_block_kernel(x_ref, w_ref, b_ref, o_ref, acc_ref, *, k, dilation):
    """Single-window variant: x_ref spans the full receptive field of o_ref.

    x_ref: (1, Cin, L_win)   w_ref: (K, Cout, Cin)   b_ref: (Cout, 1)
    o_ref: (1, Cout, TL)     acc_ref: (Cout, TL) f32 VMEM scratch
    """
    tl = o_ref.shape[2]
    for t in range(k):
        rhs = x_ref[0, :, t * dilation: t * dilation + tl]
        contrib = jnp.dot(w_ref[t], rhs, preferred_element_type=jnp.float32)
        if t == 0:
            acc_ref[...] = contrib
        else:
            acc_ref[...] += contrib
    # Epilogue: single f32 bias add + cast, lane-dense store.
    o_ref[0] = (acc_ref[...] + b_ref[...]).astype(o_ref.dtype)


def _conv1d_halo_kernel(x_ref, xh_ref, w_ref, b_ref, o_ref, acc_ref, win_ref,
                        *, k, dilation):
    """L-tiled variant: x_ref is the TL-wide main window, xh_ref a small view
    of x that carries the (K-1)*dilation halo needed past the tile end.

    win_ref: (Cin, TL + halo) VMEM scratch staging main + halo contiguously.
    """
    tl = o_ref.shape[2]
    halo = (k - 1) * dilation
    win_ref[:, :tl] = x_ref[0]
    win_ref[:, tl:tl + halo] = xh_ref[0, :, :halo]
    for t in range(k):
        rhs = win_ref[:, t * dilation: t * dilation + tl]
        contrib = jnp.dot(w_ref[t], rhs, preferred_element_type=jnp.float32)
        if t == 0:
            acc_ref[...] = contrib
        else:
            acc_ref[...] += contrib
    o_ref[0] = (acc_ref[...] + b_ref[...]).astype(o_ref.dtype)


def _conv1d_stride1(x, weight, bias, *, dilation):
    """'valid' stride-1 1-D convolution.  x: (N,Cin,L)  weight: (Cout,Cin,K)."""
    n, c_in, l = x.shape
    c_out, _, k = weight.shape
    halo = dilation * (k - 1)
    l_out = l - halo
    assert l_out >= 1, "input shorter than the receptive field"

    # (K, Cout, Cin) so each tap t is an MXU-ready (Cout, Cin) matrix.
    w_kio = jnp.transpose(weight, (2, 0, 1)).astype(x.dtype)
    b_col = bias.reshape(c_out, 1).astype(jnp.float32)

    # ---- choose the L_out tiling -------------------------------------------
    tiled = False
    tl = l_out
    hb = 0
    if l_out > _TL_MAX:
        hb = ((halo + _HALO_BLK - 1) // _HALO_BLK) * _HALO_BLK if halo else 0
        if hb <= _TL_MAX:
            tiled = True
            tl = (_TL_MAX // hb) * hb if hb else _TL_MAX
        # else: receptive field wider than a tile -> single full-L block/row.
        # TODO(synk): add Cin/Cout grid axes (and huge-dilation halo gathers)
        # for very large channel counts / dilations instead of one big block.

    cparams = pltpu.CompilerParams(
        dimension_semantics=("parallel", "parallel") if tiled else ("parallel",),
        vmem_limit_bytes=32 * 1024 * 1024,
    )
    out_shape = jax.ShapeDtypeStruct((n, c_out, l_out), x.dtype)

    if not tiled:
        # One grid step per batch row; the input block covers the full L axis.
        kernel = functools.partial(_conv1d_block_kernel, k=k, dilation=dilation)
        return pl.pallas_call(
            kernel,
            out_shape=out_shape,
            grid=(n,),
            in_specs=[
                pl.BlockSpec((1, c_in, l), lambda b: (b, 0, 0)),
                pl.BlockSpec((k, c_out, c_in), lambda b: (0, 0, 0)),
                pl.BlockSpec((c_out, 1), lambda b: (0, 0)),
            ],
            out_specs=pl.BlockSpec((1, c_out, l_out), lambda b: (b, 0, 0)),
            scratch_shapes=[pltpu.VMEM((c_out, l_out), jnp.float32)],
            compiler_params=cparams,
        )(x, w_kio, b_col)

    num_tiles = pl.cdiv(l_out, tl)
    grid = (n, num_tiles)
    x_spec = pl.BlockSpec((1, c_in, tl), lambda b, j: (b, 0, j))
    w_spec = pl.BlockSpec((k, c_out, c_in), lambda b, j: (0, 0, 0))
    b_spec = pl.BlockSpec((c_out, 1), lambda b, j: (0, 0))
    out_spec = pl.BlockSpec((1, c_out, tl), lambda b, j: (b, 0, j))

    if halo > 0:
        blk_ratio = tl // hb
        last_hb = (l - 1) // hb  # last in-bounds block of the halo view
        # The halo view starts right after the main tile; clamp its block index
        # so the trailing (clipped-output) tile never issues an OOB DMA.  The
        # clamped data is only ever multiplied into output columns that are
        # discarded by the partial-block writeback.
        halo_spec = pl.BlockSpec(
            (1, c_in, hb),
            lambda b, j: (b, 0, jnp.minimum((j + 1) * blk_ratio, last_hb)))
        kernel = functools.partial(_conv1d_halo_kernel, k=k, dilation=dilation)
        in_specs = [x_spec, halo_spec, w_spec, b_spec]
        operands = (x, x, w_kio, b_col)
        scratch = [pltpu.VMEM((c_out, tl), jnp.float32),
                   pltpu.VMEM((c_in, tl + halo), x.dtype)]
    else:  # k == 1: no halo needed
        kernel = functools.partial(_conv1d_block_kernel, k=k, dilation=dilation)
        in_specs = [x_spec, w_spec, b_spec]
        operands = (x, w_kio, b_col)
        scratch = [pltpu.VMEM((c_out, tl), jnp.float32)]

    return pl.pallas_call(
        kernel,
        out_shape=out_shape,
        grid=grid,
        in_specs=in_specs,
        out_specs=out_spec,
        scratch_shapes=scratch,
        compiler_params=cparams,
    )(*operands)


def conv1d_pallas(x, weight, bias, *, stride=1, dilation=1):
    """Forward of the PyTorch `Conv` module: y = Conv1d(x), 'valid' padding.

    x: (N, Cin, L), weight: (Cout, Cin, K), bias: (Cout,) -> (N, Cout, L_out).
    NOTE: `is_causal` in the PyTorch module only stores a flag and is never
    used in forward(), so there is nothing extra to implement for it.
    """
    n, c_in, l = x.shape
    c_out, _, k = weight.shape
    l_out = (l - dilation * (k - 1) - 1) // stride + 1
    if stride == 1:
        return _conv1d_stride1(x, weight, bias, dilation=dilation)

    # stride > 1: de-interleave x into `stride` phases in the wrapper and run
    # stride-1 convolutions (avoids strided lane loads inside the kernel).
    #   y[:, :, i] = sum_t w[:, :, t] * x[:, :, i*stride + t*dilation]
    phases = {}
    for t in range(k):
        off = t * dilation
        phases.setdefault(off % stride, []).append((off // stride, t))
    acc = jnp.zeros((n, c_out, l_out), jnp.float32)
    zero_bias = jnp.zeros_like(bias)
    for r, taps in sorted(phases.items()):
        q_max = max(q for q, _ in taps)
        w_r = jnp.zeros((c_out, c_in, q_max + 1), weight.dtype)
        for q, t in taps:
            w_r = w_r.at[:, :, q].set(weight[:, :, t])
        x_r = x[:, :, r::stride]
        y_r = _conv1d_stride1(x_r, w_r, zero_bias, dilation=1)
        acc = acc + y_r[:, :, :l_out].astype(jnp.float32)
    return (acc + bias[None, :, None].astype(jnp.float32)).astype(x.dtype)


def init_conv_params(key, in_channels, out_channels, kernel_size, gain=1.0):
    """Mirror the PyTorch module's init: weight ~ xavier_uniform
    (gain=calculate_gain('linear')=1.0), bias ~ default Conv1d init
    U(-1/sqrt(fan_in), 1/sqrt(fan_in))."""
    wkey, bkey = jax.random.split(key)
    fan_in = in_channels * kernel_size
    fan_out = out_channels * kernel_size
    bound_w = gain * (6.0 / (fan_in + fan_out)) ** 0.5
    weight = jax.random.uniform(
        wkey, (out_channels, in_channels, kernel_size), jnp.float32,
        -bound_w, bound_w)
    bound_b = 1.0 / fan_in ** 0.5
    bias = jax.random.uniform(
        bkey, (out_channels,), jnp.float32, -bound_b, bound_b)
    return weight, bias


if __name__ == "__main__":
    def run_and_check(key, n, c_in, c_out, l, k, stride, dilation):
        xkey, pkey = jax.random.split(key)
        x = jax.random.normal(xkey, (n, c_in, l), jnp.float32)
        weight, bias = init_conv_params(pkey, c_in, c_out, k, gain=1.0)
        out = conv1d_pallas(x, weight, bias, stride=stride, dilation=dilation)
        out = jax.block_until_ready(out)
        ref = lax.conv_general_dilated(
            x, weight, window_strides=(stride,), padding="VALID",
            rhs_dilation=(dilation,),
            dimension_numbers=("NCH", "OIH", "NCH"),
            precision=lax.Precision.HIGHEST) + bias[None, :, None]
        assert out.shape == ref.shape, (out.shape, ref.shape)
        err = float(jnp.max(jnp.abs(out - ref)))
        assert jnp.allclose(out, ref, atol=1e-4, rtol=1e-4), err

    key = jax.random.PRNGKey(0)
    k0, k1, k2 = jax.random.split(key, 3)
    # Small shapes implied by the module: (batch, in_channels, length).
    run_and_check(k0, n=2, c_in=4, c_out=8, l=16, k=3, stride=1, dilation=1)
    # Exercise the L-tiled + halo path (L_out > tile) with dilation > 1 and a
    # ragged trailing tile (partial output block + clamped halo view).
    run_and_check(k1, n=2, c_in=8, c_out=16, l=1200, k=3, stride=1, dilation=2)
    # Exercise the stride > 1 phase decomposition.
    run_and_check(k2, n=2, c_in=4, c_out=6, l=33, k=3, stride=2, dilation=1)
    print("KERNEL_OK")
</pallas_src>

<mosaic_0001>
module attributes {stable_mosaic.version = 11 : i64} {
  func.func @_conv1d_block_kernel(%arg0: i32, %arg1: memref<1x4x16xf32, #tpu.memory_space<vmem>>, %arg2: memref<3x8x4xf32, #tpu.memory_space<vmem>>, %arg3: memref<8x1xf32, #tpu.memory_space<vmem>>, %arg4: memref<1x8x14xf32, #tpu.memory_space<vmem>>, %arg5: memref<8x14xf32, #tpu.memory_space<vmem>>) attributes {dimension_semantics = [#tpu.dimension_semantics<parallel>], iteration_bounds = array<i64: 2>, scalar_prefetch = 0 : i64, scratch_operands = 1 : i64, tpu.core_type = #tpu.core_type<tc>, window_params = [{transform_indices = @transform_0, window_bounds = array<i64: 1, 4, 16>}, {pipeline_mode = #tpu.pipeline_mode<synchronous>, transform_indices = @transform_1, window_bounds = array<i64: 3, 8, 4>}, {pipeline_mode = #tpu.pipeline_mode<synchronous>, transform_indices = @transform_2, window_bounds = array<i64: 8, 1>}, {transform_indices = @transform_3, window_bounds = array<i64: 1, 8, 14>}]} {
    %c0 = arith.constant 0 : index
    %c0_0 = arith.constant 0 : index
    %c0_1 = arith.constant 0 : index
    %0 = vector.load %arg1[%c0, %c0_0, %c0_1] : memref<1x4x16xf32, #tpu.memory_space<vmem>>, vector<1x4x14xf32>
    %1 = vector.shape_cast %0 : vector<1x4x14xf32> to vector<4x14xf32>
    %c0_2 = arith.constant 0 : index
    %c0_3 = arith.constant 0 : index
    %c0_4 = arith.constant 0 : index
    %2 = vector.load %arg2[%c0_2, %c0_3, %c0_4] : memref<3x8x4xf32, #tpu.memory_space<vmem>>, vector<1x8x4xf32>
    %3 = vector.shape_cast %2 : vector<1x8x4xf32> to vector<8x4xf32>
    %cst = arith.constant dense<0.000000e+00> : vector<8x14xf32>
    %4 = tpu.matmul %3, %1, %cst {dimension_numbers = #tpu.dot_dimension_numbers<[1], [0], [0], [1], [0, 0, 1, 1], [], []>} : vector<8x4xf32>, vector<4x14xf32>, vector<8x14xf32> -> vector<8x14xf32>
    %c0_5 = arith.constant 0 : index
    %c0_6 = arith.constant 0 : index
    %5 = vector.load %arg5[%c0_5, %c0_6] : memref<8x14xf32, #tpu.memory_space<vmem>>, vector<8x14xf32>
    tpu.vector_store %arg5[%c0_5, %c0_6], %4 {strides = array<i32>} : memref<8x14xf32, #tpu.memory_space<vmem>>, vector<8x14xf32>,
    %c0_7 = arith.constant 0 : index
    %c0_8 = arith.constant 0 : index
    %c1 = arith.constant 1 : index
    %6 = vector.load %arg1[%c0_7, %c0_8, %c1] : memref<1x4x16xf32, #tpu.memory_space<vmem>>, vector<1x4x14xf32>
    %7 = vector.shape_cast %6 : vector<1x4x14xf32> to vector<4x14xf32>
    %c1_9 = arith.constant 1 : index
    %c0_10 = arith.constant 0 : index
    %c0_11 = arith.constant 0 : index
    %8 = vector.load %arg2[%c1_9, %c0_10, %c0_11] : memref<3x8x4xf32, #tpu.memory_space<vmem>>, vector<1x8x4xf32>
    %9 = vector.shape_cast %8 : vector<1x8x4xf32> to vector<8x4xf32>
    %cst_12 = arith.constant dense<0.000000e+00> : vector<8x14xf32>
    %10 = tpu.matmul %9, %7, %cst_12 {dimension_numbers = #tpu.dot_dimension_numbers<[1], [0], [0], [1], [0, 0, 1, 1], [], []>} : vector<8x4xf32>, vector<4x14xf32>, vector<8x14xf32> -> vector<8x14xf32>
    %c0_13 = arith.constant 0 : index
    %c0_14 = arith.constant 0 : index
    %11 = vector.load %arg5[%c0_13, %c0_14] : memref<8x14xf32, #tpu.memory_space<vmem>>, vector<8x14xf32>
    %12 = arith.addf %11, %10 : vector<8x14xf32>
    %c0_15 = arith.constant 0 : index
    %c0_16 = arith.constant 0 : index
    %13 = vector.load %arg5[%c0_15, %c0_16] : memref<8x14xf32, #tpu.memory_space<vmem>>, vector<8x14xf32>
    tpu.vector_store %arg5[%c0_15, %c0_16], %12 {strides = array<i32>} : memref<8x14xf32, #tpu.memory_space<vmem>>, vector<8x14xf32>,
    %c0_17 = arith.constant 0 : index
    %c0_18 = arith.constant 0 : index
    %c2 = arith.constant 2 : index
    %14 = vector.load %arg1[%c0_17, %c0_18, %c2] : memref<1x4x16xf32, #tpu.memory_space<vmem>>, vector<1x4x14xf32>
    %15 = vector.shape_cast %14 : vector<1x4x14xf32> to vector<4x14xf32>
    %c2_19 = arith.constant 2 : index
    %c0_20 = arith.constant 0 : index
    %c0_21 = arith.constant 0 : index
    %16 = vector.load %arg2[%c2_19, %c0_20, %c0_21] : memref<3x8x4xf32, #tpu.memory_space<vmem>>, vector<1x8x4xf32>
    %17 = vector.shape_cast %16 : vector<1x8x4xf32> to vector<8x4xf32>
    %cst_22 = arith.constant dense<0.000000e+00> : vector<8x14xf32>
    %18 = tpu.matmul %17, %15, %cst_22 {dimension_numbers = #tpu.dot_dimension_numbers<[1], [0], [0], [1], [0, 0, 1, 1], [], []>} : vector<8x4xf32>, vector<4x14xf32>, vector<8x14xf32> -> vector<8x14xf32>
    %c0_23 = arith.constant 0 : index
    %c0_24 = arith.constant 0 : index
    %19 = vector.load %arg5[%c0_23, %c0_24] : memref<8x14xf32, #tpu.memory_space<vmem>>, vector<8x14xf32>
    %20 = arith.addf %19, %18 : vector<8x14xf32>
    %c0_25 = arith.constant 0 : index
    %c0_26 = arith.constant 0 : index
    %21 = vector.load %arg5[%c0_25, %c0_26] : memref<8x14xf32, #tpu.memory_space<vmem>>, vector<8x14xf32>
    tpu.vector_store %arg5[%c0_25, %c0_26], %20 {strides = array<i32>} : memref<8x14xf32, #tpu.memory_space<vmem>>, vector<8x14xf32>,
    %c0_27 = arith.constant 0 : index
    %c0_28 = arith.constant 0 : index
    %22 = vector.load %arg5[%c0_27, %c0_28] : memref<8x14xf32, #tpu.memory_space<vmem>>, vector<8x14xf32>
    %c0_29 = arith.constant 0 : index
    %c0_30 = arith.constant 0 : index
    %23 = vector.load %arg3[%c0_29, %c0_30] : memref<8x1xf32, #tpu.memory_space<vmem>>, vector<8x1xf32>
    %24 = vector.broadcast %23 : vector<8x1xf32> to vector<8x14xf32>
    %25 = arith.addf %22, %24 : vector<8x14xf32>
    %c0_31 = arith.constant 0 : index
    %c0_32 = arith.constant 0 : index
    %c0_33 = arith.constant 0 : index
    %26 = vector.load %arg4[%c0_31, %c0_32, %c0_33] : memref<1x8x14xf32, #tpu.memory_space<vmem>>, vector<1x8x14xf32>
    %27 = vector.shape_cast %26 : vector<1x8x14xf32> to vector<8x14xf32>
    %28 = vector.shape_cast %25 : vector<8x14xf32> to vector<1x8x14xf32>
    tpu.vector_store %arg4[%c0_31, %c0_32, %c0_33], %28 {strides = array<i32>} : memref<1x8x14xf32, #tpu.memory_space<vmem>>, vector<1x8x14xf32>,
    return
  }
  func.func @transform_0(%arg0: i32) -> (i32, i32, i32) {
    %c0_i32 = arith.constant 0 : i32
    %c0_i32_0 = arith.constant 0 : i32
    %c0_i32_1 = arith.constant 0 : i32
    return %arg0, %c0_i32, %c0_i32_0 : i32, i32, i32
  }
  func.func @transform_1(%arg0: i32) -> (i32, i32, i32) {
    %c0_i32 = arith.constant 0 : i32
    %c0_i32_0 = arith.constant 0 : i32
    %c0_i32_1 = arith.constant 0 : i32
    %c0_i32_2 = arith.constant 0 : i32
    return %c0_i32, %c0_i32_0, %c0_i32_1 : i32, i32, i32
  }
  func.func @transform_2(%arg0: i32) -> (i32, i32) {
    %c0_i32 = arith.constant 0 : i32
    %c0_i32_0 = arith.constant 0 : i32
    %c0_i32_1 = arith.constant 0 : i32
    return %c0_i32, %c0_i32_0 : i32, i32
  }
  func.func @transform_3(%arg0: i32) -> (i32, i32, i32) {
    %c0_i32 = arith.constant 0 : i32
    %c0_i32_0 = arith.constant 0 : i32
    %c0_i32_1 = arith.constant 0 : i32
    return %arg0, %c0_i32, %c0_i32_0 : i32, i32, i32
  }
}

</mosaic_0001>

<llo_original>
// kernel: tpu_custom_call.1
$region0: #{tpu_custom_call.1}
  #allocation0 [shape = 'u32[]', space=smem, size = 0x4, offset = 0x4, fixed_abs, tag = 'smem constant byte address 0x4 - core index']
  #allocation1 [shape = 'u32[144,128]{1,0:T(1,128)}', space=vmem, size = 0x12000, scoped, tag = 'internal scratch']
  #allocation2 [shape = 'f32[8,14]{1,0:T(8,128)}', space=vmem, size = 0x1000, scoped, tag = 'scratch operand']
  %s0 = inlined_call_operand.vmem [shape: f32[2,4,16], index: 0, kind: input, shape index: {}]
  %s1 = inlined_call_operand.vmem [shape: f32[3,8,4], index: 1, kind: input, shape index: {}]
  %s2 = inlined_call_operand.vmem [shape: f32[8,1], index: 2, kind: input, shape index: {}]
  %s3 = inlined_call_operand.hbm [shape: f32[2,8,14], index: 3, kind: output, shape index: {}]
  %s4 = sld [smem:[#allocation0]]
  $region45: #{tpu_custom_call.1} parent=0
    _
  %s6 = ssub.s32 1, %s4
  %s7 = scalar_select 0, %s6, %s4
  $region1: #{tpu_custom_call.1} parent=0
    #allocation3 [shape = 'u8[8192]{0}', space=vmem, size = 0x2000, scoped, tag = 'output window, operand 0']
    #allocation4 [shape = 's32[2]{0}', space=sflag, size = 0x8, scoped, tag = 'scoped memory for tpu_custom_call.1']
    %8 = vsyncpa [#allocation4], 0
    %s9 = scalar_lea.sflag [#allocation4], 1
    %10 = vsyncpa %s9, 0
    loop: start=0, step=1, limit=4
    $region2: #{tpu_custom_call.1} parent=1 // loop_pre_header
      _
    $region3: #{tpu_custom_call.1} parent=1 // loop_header
      %s12 = sphi 0, %s16
      %p13 = scmp.ge.s32.totalorder %s12, 4
      %s22 = sphi 0, %s24
      %s25 = sphi 0, %s22
      %s26 = sphi 0, %s25
      %s42 = sphi 0, %s26
      %s46 = sphi 0, %s46
      %s48 = sphi 0, %s46
      %s49 = sphi 0, %s48
      %s63 = sphi 0, %s49
      %s67 = sphi 0, %s67
      %s69 = sphi 0, %s67
      %s70 = sphi 0, %s69
      %s84 = sphi 0, %s70
      %s90 = sphi 0, %s92
      %s93 = sphi 0, %s90
      %s94 = sphi 0, %s93
      %s110 = sphi 0, %s94
    $region4: #{tpu_custom_call.1} parent=1 // loop_header_branch
      %15 = sbr.rel (%p13) target = $region8
    $region5: #{tpu_custom_call.1} parent=1 // loop_body
      %s17 = ssub.s32 %s12, 1
      %s18 = ssub.s32 %s12, 2
      %s19 = sadd.s32 %s12, 1
      %s20 = ssub.s32 %s12, %s19
      %p21 = scmp.eq.s32.totalorder %s20, 0
      %s23 = sadd.s32 %s22, 1
      %s24 = scalar_select %p21, %s22, %s23
      %p27 = pneg %p21
      %p28 = scmp.eq.s32.totalorder %s12, 1
      %p29 = por %p27, %p28
      %p30 = scmp.ne.s32.totalorder %s22, %s25
      %p31 = scmp.eq.s32.totalorder %s12, 0
      %p32 = por %p30, %p31
      %p33 = scmp.ne.s32.totalorder %s22, %s25
      %p34 = scmp.eq.s32.totalorder %s17, 1
      %p35 = por %p33, %p34
      %p36 = scmp.ne.s32.totalorder %s25, %s26
      %p37 = scmp.eq.s32.totalorder %s17, 0
      %p38 = por %p36, %p37
      %p39 = scmp.ne.s32.totalorder %s25, %s26
      %p40 = scmp.eq.s32.totalorder %s18, 1
      %p41 = por %p39, %p40
      %p43 = scmp.ne.s32.totalorder %s26, %s42
      %p44 = scmp.eq.s32.totalorder %s18, 0
      %p45 = por %p43, %p44
      %s47 = sadd.s32 %s46, 1
      %p50 = scmp.eq.s32.totalorder %s12, 1
      %p51 = scmp.ne.s32.totalorder %s46, %s48
      %p52 = scmp.eq.s32.totalorder %s12, 0
      %p53 = por %p51, %p52
      %p54 = scmp.ne.s32.totalorder %s46, %s48
      %p55 = scmp.eq.s32.totalorder %s17, 1
      %p56 = por %p54, %p55
      %p57 = scmp.ne.s32.totalorder %s48, %s49
      %p58 = scmp.eq.s32.totalorder %s17, 0
      %p59 = por %p57, %p58
      %p60 = scmp.ne.s32.totalorder %s48, %s49
      %p61 = scmp.eq.s32.totalorder %s18, 1
      %p62 = por %p60, %p61
      %p64 = scmp.ne.s32.totalorder %s49, %s63
      %p65 = scmp.eq.s32.totalorder %s18, 0
      %p66 = por %p64, %p65
      %s68 = sadd.s32 %s67, 1
      %p71 = scmp.eq.s32.totalorder %s12, 1
      %p72 = scmp.ne.s32.totalorder %s67, %s69
      %p73 = scmp.eq.s32.totalorder %s12, 0
      %p74 = por %p72, %p73
      %p75 = scmp.ne.s32.totalorder %s67, %s69
      %p76 = scmp.eq.s32.totalorder %s17, 1
      %p77 = por %p75, %p76
      %p78 = scmp.ne.s32.totalorder %s69, %s70
      %p79 = scmp.eq.s32.totalorder %s17, 0
      %p80 = por %p78, %p79
      %p81 = scmp.ne.s32.totalorder %s69, %s70
      %p82 = scmp.eq.s32.totalorder %s18, 1
      %p83 = por %p81, %p82
      %p85 = scmp.ne.s32.totalorder %s70, %s84
      %p86 = scmp.eq.s32.totalorder %s18, 0
      %p87 = por %p85, %p86
      %s88 = ssub.s32 %s12, %s19
      %p89 = scmp.eq.s32.totalorder %s88, 0
      %s91 = sadd.s32 %s90, 1
      %s92 = scalar_select %p89, %s90, %s91
      %p95 = pneg %p89
      %p96 = scmp.eq.s32.totalorder %s12, 1
      %p97 = por %p95, %p96
      %p98 = scmp.ne.s32.totalorder %s90, %s93
      %p99 = scmp.eq.s32.totalorder %s12, 0
      %p100 = por %p98, %p99
      %p101 = scmp.ne.s32.totalorder %s90, %s93
      %p102 = scmp.eq.s32.totalorder %s17, 1
      %p103 = por %p101, %p102
      %p104 = scmp.ne.s32.totalorder %s93, %s94
      %p105 = scmp.eq.s32.totalorder %s17, 0
      %p106 = por %p104, %p105
      %p107 = scmp.ne.s32.totalorder %s93, %s94
      %p108 = scmp.eq.s32.totalorder %s18, 1
      %p109 = por %p107, %p108
      %p111 = scmp.ne.s32.totalorder %s94, %s110
      %p112 = scmp.eq.s32.totalorder %s18, 0
      %p113 = por %p111, %p112
      %p114 = scmp.le.s32.totalorder 1, %s12
      %p115 = scmp.lt.s32.totalorder %s12, 3
      %p116 = pnand %p114, %p115
      %p117 = pneg %p116
      // Predicated region
      $region9: #{tpu_custom_call.1} parent=5 // pred_check
        _
      $region10: #{tpu_custom_call.1} parent=5 // pred_check_branch
        %119 = sbr.rel (%p116) target = $region12
      $region11: #{tpu_custom_call.1} parent=5 // pred_region
        %s120 = ssub.s32 %s12, 1
        // Predicated region
        $region13: #{tpu_custom_call.1} parent=11 // pred_check
          %p121 = pneg %p59
        $region14: #{tpu_custom_call.1} parent=11 // pred_check_branch
          %123 = sbr.rel (%p121) target = $region16
        $region15: #{tpu_custom_call.1} parent=11 // pred_region
          _
        $region16: #{tpu_custom_call.1} parent=11 // pred_fallthru
          _
        // Predicated region
        $region17: #{tpu_custom_call.1} parent=11 // pred_check
          %p124 = pneg %p80
        $region18: #{tpu_custom_call.1} parent=11 // pred_check_branch
          %126 = sbr.rel (%p124) target = $region20
        $region19: #{tpu_custom_call.1} parent=11 // pred_region
          _
        $region20: #{tpu_custom_call.1} parent=11 // pred_fallthru
          _
      $region12: #{tpu_custom_call.1} parent=5 // pred_fallthru
        _
      %p127 = scmp.lt.s32.totalorder %s12, 2
      // Predicated region
      $region21: #{tpu_custom_call.1} parent=5 // pred_check
        %p128 = pneg %p127
      $region22: #{tpu_custom_call.1} parent=5 // pred_check_branch
        %130 = sbr.rel (%p128) target = $region24
      $region23: #{tpu_custom_call.1} parent=5 // pred_region
        // Predicated region
        $region25: #{tpu_custom_call.1} parent=23 // pred_check
          %p131 = pneg %p32
        $region26: #{tpu_custom_call.1} parent=23 // pred_check_branch
          %133 = sbr.rel (%p131) target = $region28
        $region27: #{tpu_custom_call.1} parent=23 // pred_region
          %p134 = scmp.lt.s32.totalorder %s12, 1
          %s135 = scalar_select %p134, %s12, 1
          %s136 = smul.addr %s135, 4
          %s137 = scalar_lea.vmem %s0, %s136
        $region28: #{tpu_custom_call.1} parent=23 // pred_fallthru
          _
      $region24: #{tpu_custom_call.1} parent=5 // pred_fallthru
        _
      %p138 = scmp.le.s32.totalorder 1, %s12
      %p139 = scmp.lt.s32.totalorder %s12, 3
      %p140 = pnand %p138, %p139
      %p141 = pneg %p140
      // Predicated region
      $region29: #{tpu_custom_call.1} parent=5 // pred_check
        _
      $region30: #{tpu_custom_call.1} parent=5 // pred_check_branch
        %143 = sbr.rel (%p140) target = $region32
      $region31: #{tpu_custom_call.1} parent=5 // pred_region
        %s144 = ssub.s32 %s12, 1
        %p145 = scmp.lt.s32.totalorder %s17, 1
        %s146 = scalar_select %p145, %s17, 1
        %s147 = smul.addr %s146, 4
        %s148 = scalar_lea.vmem %s0, %s147
        %p149 = pneg %p38
        %p150 = pneg %p35
        %p151 = pneg %p59
        %p152 = pneg %p56
        %p153 = pneg %p80
        %p154 = pneg %p77
        %p155 = pneg %p106
        %p156 = pneg %p103
        %s157 = sand.u32 %s93, 1
        %s158 = scalar_lea.sflag [#allocation4], %s157
        %s159 = sand.u32 %s93, 1
        %s160 = smul.addr %s159, 8
        %s161 = scalar_lea.vmem [#allocation3], %s160
        %p162 = scmp.lt.s32.totalorder %s17, 1
        %s163 = scalar_select %p162, %s17, 1
        %s164 = smul.addr %s163, 4
        %s165 = scalar_lea.vmem %s0, %s164
        %v166 = vld [vmem:[%s165] sm:$0xf]
        %v167 = vld [vmem:[%s1] sm:$0xff]
        %vm168 = vcmask 31744
        %v170 = vsel %vm168, %v167, 0
        %vm172 = vcmask 1043456
        %v174 = vsel %vm172, %v166, 0
        %176 = vmatprep.subr.mxu0 0.0
        %177 = vmatpush1.msra.mxu0 %v174
        %178 = vmatprep.subr.mxu0 0.0
        %179 = vmatpush1.msra.mxu0 0.0
        %180 = vmatprep.subr.mxu0 0.0
        %181 = vmatpush1.msra.mxu0 0.0
        %182 = vmatprep.subr.mxu0 0.0
        %183 = vmatpush1.msra.mxu0 0.0
        %184 = vmatprep.subr.mxu0 0.0
        %185 = vmatpush1.msra.mxu0 0.0
        %186 = vmatprep.subr.mxu0 0.0
        %187 = vmatpush1.msra.mxu0 0.0
        %188 = vmatprep.subr.mxu0 0.0
        %189 = vmatpush1.msra.mxu0 0.0
        %190 = vmatprep.subr.mxu0 0.0
        %191 = vmatpush1.msra.mxu0 0.0
        %192 = vmatprep.subr.mxu0 0.0
        %193 = vmatpush1.msra.mxu0 0.0
        %194 = vmatprep.subr.mxu0 0.0
        %195 = vmatpush1.msra.mxu0 0.0
        %196 = vmatprep.subr.mxu0 0.0
        %197 = vmatpush1.msra.mxu0 0.0
        %198 = vmatprep.subr.mxu0 0.0
        %199 = vmatpush1.msra.mxu0 0.0
        %200 = vmatprep.subr.mxu0 0.0
        %201 = vmatpush1.msra.mxu0 0.0
        %202 = vmatprep.subr.mxu0 0.0
        %203 = vmatpush1.msra.mxu0 0.0
        %204 = vmatprep.subr.mxu0 0.0
        %205 = vmatpush1.msra.mxu0 0.0
        %206 = vmatprep.subr.mxu0 0.0
        %207 = vmatpush1.msra.mxu0 0.0
        %208 = vmatprep.subr.mxu0 0.0
        %209 = vmatpush1.msra.mxu0 0.0
        %210 = vmatprep.subr.mxu0 0.0
        %211 = vmatpush1.msra.mxu0 0.0
        %212 = vmatprep.subr.mxu0 0.0
        %213 = vmatpush1.msra.mxu0 0.0
        %214 = vmatprep.subr.mxu0 0.0
        %215 = vmatpush1.msra.mxu0 0.0
        %216 = vmatprep.subr.mxu0 0.0
        %217 = vmatpush1.msra.mxu0 0.0
        %218 = vmatprep.subr.mxu0 0.0
        %219 = vmatpush1.msra.mxu0 0.0
        %220 = vmatprep.subr.mxu0 0.0
        %221 = vmatpush1.msra.mxu0 0.0
        %222 = vmatprep.subr.mxu0 0.0
        %223 = vmatpush1.msra.mxu0 0.0
        %224 = vmatprep.subr.mxu0 0.0
        %225 = vmatpush1.msra.mxu0 0.0
        %226 = vmatprep.subr.mxu0 0.0
        %227 = vmatpush1.msra.mxu0 0.0
        %228 = vmatprep.subr.mxu0 0.0
        %229 = vmatpush1.msra.mxu0 0.0
        %230 = vmatprep.subr.mxu0 0.0
        %231 = vmatpush1.msra.mxu0 0.0
        %232 = vmatprep.subr.mxu0 0.0
        %233 = vmatpush1.msra.mxu0 0.0
        %234 = vmatprep.subr.mxu0 0.0
        %235 = vmatpush1.msra.mxu0 0.0
        %236 = vmatprep.subr.mxu0 0.0
        %237 = vmatpush1.msra.mxu0 0.0
        %238 = vmatprep.subr.mxu0 0.0
        %239 = vmatpush1.msra.mxu0 0.0
        %240 = vmatprep.mubr.f32.mxu0 0.0
        %241 = vmatmul.mubr.f32.gmra.mrb[0].mxu0 %v170
        %v242 = vpop.f32.mrb[0].mxu0
        %v243 = vadd.f32 0.0, %v242
        %v244 = vpop.f32.mrb[0].mxu0
        %245 = vdwg.mxu0
        %vm246 = vcmask 113664
        %247 = vst.msk [vmem:[#allocation2] sm:$0xff] %vm246, %v243
        %v248 = vld [vmem:[%s165] sm:$0xf]
        %s249 = scalar_lea.vmem %s1, 8
        %v250 = vld [vmem:[%s249] sm:$0xff]
        %252 = vrot.lane.b32.xlu0 %v248, 127
        %v253 = vpop.permute.xlu0 %252
        %v255 = vsel %vm168, %v250, 0
        %v257 = vsel %vm172, %v253, 0
        %259 = vmatprep.subr.mxu0 0.0
        %260 = vmatpush1.msra.mxu0 %v257
        %261 = vmatprep.subr.mxu0 0.0
        %262 = vmatpush1.msra.mxu0 0.0
        %263 = vmatprep.subr.mxu0 0.0
        %264 = vmatpush1.msra.mxu0 0.0
        %265 = vmatprep.subr.mxu0 0.0
        %266 = vmatpush1.msra.mxu0 0.0
        %267 = vmatprep.subr.mxu0 0.0
        %268 = vmatpush1.msra.mxu0 0.0
        %269 = vmatprep.subr.mxu0 0.0
        %270 = vmatpush1.msra.mxu0 0.0
        %271 = vmatprep.subr.mxu0 0.0
        %272 = vmatpush1.msra.mxu0 0.0
        %273 = vmatprep.subr.mxu0 0.0
        %274 = vmatpush1.msra.mxu0 0.0
        %275 = vmatprep.subr.mxu0 0.0
        %276 = vmatpush1.msra.mxu0 0.0
        %277 = vmatprep.subr.mxu0 0.0
        %278 = vmatpush1.msra.mxu0 0.0
        %279 = vmatprep.subr.mxu0 0.0
        %280 = vmatpush1.msra.mxu0 0.0
        %281 = vmatprep.subr.mxu0 0.0
        %282 = vmatpush1.msra.mxu0 0.0
        %283 = vmatprep.subr.mxu0 0.0
        %284 = vmatpush1.msra.mxu0 0.0
        %285 = vmatprep.subr.mxu0 0.0
        %286 = vmatpush1.msra.mxu0 0.0
        %287 = vmatprep.subr.mxu0 0.0
        %288 = vmatpush1.msra.mxu0 0.0
        %289 = vmatprep.subr.mxu0 0.0
        %290 = vmatpush1.msra.mxu0 0.0
        %291 = vmatprep.subr.mxu0 0.0
        %292 = vmatpush1.msra.mxu0 0.0
        %293 = vmatprep.subr.mxu0 0.0
        %294 = vmatpush1.msra.mxu0 0.0
        %295 = vmatprep.subr.mxu0 0.0
        %296 = vmatpush1.msra.mxu0 0.0
        %297 = vmatprep.subr.mxu0 0.0
        %298 = vmatpush1.msra.mxu0 0.0
        %299 = vmatprep.subr.mxu0 0.0
        %300 = vmatpush1.msra.mxu0 0.0
        %301 = vmatprep.subr.mxu0 0.0
        %302 = vmatpush1.msra.mxu0 0.0
        %303 = vmatprep.subr.mxu0 0.0
        %304 = vmatpush1.msra.mxu0 0.0
        %305 = vmatprep.subr.mxu0 0.0
        %306 = vmatpush1.msra.mxu0 0.0
        %307 = vmatprep.subr.mxu0 0.0
        %308 = vmatpush1.msra.mxu0 0.0
        %309 = vmatprep.subr.mxu0 0.0
        %310 = vmatpush1.msra.mxu0 0.0
        %311 = vmatprep.subr.mxu0 0.0
        %312 = vmatpush1.msra.mxu0 0.0
        %313 = vmatprep.subr.mxu0 0.0
        %314 = vmatpush1.msra.mxu0 0.0
        %315 = vmatprep.subr.mxu0 0.0
        %316 = vmatpush1.msra.mxu0 0.0
        %317 = vmatprep.subr.mxu0 0.0
        %318 = vmatpush1.msra.mxu0 0.0
        %319 = vmatprep.subr.mxu0 0.0
        %320 = vmatpush1.msra.mxu0 0.0
        %321 = vmatprep.subr.mxu0 0.0
        %322 = vmatpush1.msra.mxu0 0.0
        %323 = vmatprep.mubr.f32.mxu0 0.0
        %324 = vmatmul.mubr.f32.gmra.mrb[0].mxu0 %v255
        %v325 = vpop.f32.mrb[0].mxu0
        %v326 = vadd.f32 0.0, %v325
        %v327 = vpop.f32.mrb[0].mxu0
        %328 = vdwg.mxu0
        %v329 = vld [vmem:[#allocation2] sm:$0xff]
        %v330 = vadd.f32 %v329, %v326
        %331 = vst.msk [vmem:[#allocation2] sm:$0xff] %vm246, %v330
        %v332 = vld [vmem:[%s165] sm:$0xf]
        %s333 = scalar_lea.vmem %s1, 16
        %v334 = vld [vmem:[%s333] sm:$0xff]
        %336 = vrot.lane.b32.xlu0 %v332, 126
        %v337 = vpop.permute.xlu0 %336
        %v339 = vsel %vm168, %v334, 0
        %v341 = vsel %vm172, %v337, 0
        %343 = vmatprep.subr.mxu0 0.0
        %344 = vmatpush1.msra.mxu0 %v341
        %345 = vmatprep.subr.mxu0 0.0
        %346 = vmatpush1.msra.mxu0 0.0
        %347 = vmatprep.subr.mxu0 0.0
        %348 = vmatpush1.msra.mxu0 0.0
        %349 = vmatprep.subr.mxu0 0.0
        %350 = vmatpush1.msra.mxu0 0.0
        %351 = vmatprep.subr.mxu0 0.0
        %352 = vmatpush1.msra.mxu0 0.0
        %353 = vmatprep.subr.mxu0 0.0
        %354 = vmatpush1.msra.mxu0 0.0
        %355 = vmatprep.subr.mxu0 0.0
        %356 = vmatpush1.msra.mxu0 0.0
        %357 = vmatprep.subr.mxu0 0.0
        %358 = vmatpush1.msra.mxu0 0.0
        %359 = vmatprep.subr.mxu0 0.0
        %360 = vmatpush1.msra.mxu0 0.0
        %361 = vmatprep.subr.mxu0 0.0
        %362 = vmatpush1.msra.mxu0 0.0
        %363 = vmatprep.subr.mxu0 0.0
        %364 = vmatpush1.msra.mxu0 0.0
        %365 = vmatprep.subr.mxu0 0.0
        %366 = vmatpush1.msra.mxu0 0.0
        %367 = vmatprep.subr.mxu0 0.0
        %368 = vmatpush1.msra.mxu0 0.0
        %369 = vmatprep.subr.mxu0 0.0
        %370 = vmatpush1.msra.mxu0 0.0
        %371 = vmatprep.subr.mxu0 0.0
        %372 = vmatpush1.msra.mxu0 0.0
        %373 = vmatprep.subr.mxu0 0.0
        %374 = vmatpush1.msra.mxu0 0.0
        %375 = vmatprep.subr.mxu0 0.0
        %376 = vmatpush1.msra.mxu0 0.0
        %377 = vmatprep.subr.mxu0 0.0
        %378 = vmatpush1.msra.mxu0 0.0
        %379 = vmatprep.subr.mxu0 0.0
        %380 = vmatpush1.msra.mxu0 0.0
        %381 = vmatprep.subr.mxu0 0.0
        %382 = vmatpush1.msra.mxu0 0.0
        %383 = vmatprep.subr.mxu0 0.0
        %384 = vmatpush1.msra.mxu0 0.0
        %385 = vmatprep.subr.mxu0 0.0
        %386 = vmatpush1.msra.mxu0 0.0
        %387 = vmatprep.subr.mxu0 0.0
        %388 = vmatpush1.msra.mxu0 0.0
        %389 = vmatprep.subr.mxu0 0.0
        %390 = vmatpush1.msra.mxu0 0.0
        %391 = vmatprep.subr.mxu0 0.0
        %392 = vmatpush1.msra.mxu0 0.0
        %393 = vmatprep.subr.mxu0 0.0
        %394 = vmatpush1.msra.mxu0 0.0
        %395 = vmatprep.subr.mxu0 0.0
        %396 = vmatpush1.msra.mxu0 0.0
        %397 = vmatprep.subr.mxu0 0.0
        %398 = vmatpush1.msra.mxu0 0.0
        %399 = vmatprep.subr.mxu0 0.0
        %400 = vmatpush1.msra.mxu0 0.0
        %401 = vmatprep.subr.mxu0 0.0
        %402 = vmatpush1.msra.mxu0 0.0
        %403 = vmatprep.subr.mxu0 0.0
        %404 = vmatpush1.msra.mxu0 0.0
        %405 = vmatprep.subr.mxu0 0.0
        %406 = vmatpush1.msra.mxu0 0.0
        %407 = vmatprep.mubr.f32.mxu0 0.0
        %408 = vmatmul.mubr.f32.gmra.mrb[0].mxu0 %v339
        %v409 = vpop.f32.mrb[0].mxu0
        %v410 = vadd.f32 0.0, %v409
        %v411 = vpop.f32.mrb[0].mxu0
        %412 = vdwg.mxu0
        %v413 = vld [vmem:[#allocation2] sm:$0xff]
        %v414 = vadd.f32 %v413, %v410
        %415 = vst.msk [vmem:[#allocation2] sm:$0xff] %vm246, %v414
        %v416 = vld [vmem:[#allocation2] sm:$0xff]
        %v417 = vld [vmem:[%s2] sm:$0xff]
        %419 = vset.pattern.permute.xlu0 0
        %420 = vperm.xlu0 %419, %v417
        %v421 = vpop.permute.xlu0 %420
        %v423 = vadd.f32 %v416, %v421
        %424 = vst.msk [vmem:[%s161] sm:$0xff] %vm246, %v423
        %s425 = sand.u32 %s93, 1
        %s426 = scalar_lea.sflag [#allocation4], %s425
        %s427 = sand.u32 %s93, 1
        %s428 = smul.addr %s427, 8
        %s429 = scalar_lea.vmem [#allocation3], %s428
        // Predicated region
        $region33: #{tpu_custom_call.1} parent=31 // pred_check
          %p430 = pneg %p103
        $region34: #{tpu_custom_call.1} parent=31 // pred_check_branch
          %432 = sbr.rel (%p430) target = $region36
        $region35: #{tpu_custom_call.1} parent=31 // pred_region
          %s434 = ssub.s32 128, 128
          %435 = vsyncadd %s426, %s434
          %s436 = smul.addr %s17, 128
          %s437 = scalar_lea.hbm %s3, %s436
          %s439 = sshll.u32 %s429, 4
          %s440 = int_to_ptr.vmem [resolvable:$true] %s439
          %442 = dma.vmem_to_hbm [thread:$0]  %s440, 128, %s437, %s426
        $region36: #{tpu_custom_call.1} parent=31 // pred_fallthru
          _
      $region32: #{tpu_custom_call.1} parent=5 // pred_fallthru
        _
      %p443 = scmp.le.s32.totalorder 2, %s12
      // Predicated region
      $region37: #{tpu_custom_call.1} parent=5 // pred_check
        %p444 = pneg %p443
      $region38: #{tpu_custom_call.1} parent=5 // pred_check_branch
        %446 = sbr.rel (%p444) target = $region40
      $region39: #{tpu_custom_call.1} parent=5 // pred_region
        %s447 = ssub.s32 %s12, 2
        // Predicated region
        $region41: #{tpu_custom_call.1} parent=39 // pred_check
          %p448 = pneg %p109
        $region42: #{tpu_custom_call.1} parent=39 // pred_check_branch
          %450 = sbr.rel (%p448) target = $region44
        $region43: #{tpu_custom_call.1} parent=39 // pred_region
          %s451 = sand.u32 %s94, 1
          %s452 = scalar_lea.sflag [#allocation4], %s451
          %s453 = sand.u32 %s94, 1
          %s454 = smul.addr %s453, 8
          %s455 = scalar_lea.vmem [#allocation3], %s454
          %456 = dma.done %s452, 128
        $region44: #{tpu_custom_call.1} parent=39 // pred_fallthru
          _
      $region40: #{tpu_custom_call.1} parent=5 // pred_fallthru
        _
    $region6: #{tpu_custom_call.1} parent=1 // loop_footer
      %s16 = sadd.s32 1, %s12
    $region7: #{tpu_custom_call.1} parent=1 // loop_footer_branch
      %11 = sbr.rel target = $region3
    $region8: #{tpu_custom_call.1} parent=1 // loop_exit
      _
    %457 = vsyncpa [#allocation4], 1
    %s458 = scalar_lea.sflag [#allocation4], 1
    %459 = vsyncpa %s458, 1

</llo_original>
